<compile_context>
chip_gen: v7x
topology: tpu7x:2x2x1
jax: 0.10.0
libtpu: 0.0.40
codegen_flags: <defaults>
</compile_context>

<pallas_src>
import jax
import jax.numpy as jnp
from jax.experimental import pallas as pl
from jax.experimental.pallas import tpu as pltpu


def _generator_kernel(x_ref, w_ref, b_ref, o_ref):
    # x_ref: (tile_m, d_model)   activations tile (compute dtype, e.g. bf16)
    # w_ref: (tile_n, d_model)   weight tile in PyTorch layout (vocab, d_model)
    # b_ref: (1, tile_n)         bias tile, f32
    # o_ref: (tile_m, tile_n)    output logits tile
    acc = jax.lax.dot_general(
        x_ref[...], w_ref[...],
        dimension_numbers=(((1,), (1,)), ((), ())),   # contract last dims (x @ W^T)
        preferred_element_type=jnp.float32,
    )
    o_ref[...] = (acc + b_ref[...]).astype(o_ref.dtype)


def generator_forward(x, weight, bias, *, tile_m=512, tile_n=512,
                      compute_dtype=jnp.bfloat16):
    """Pallas implementation of Generator.forward (nn.Linear(d_model, vocab)).

    x:      (batch, seq, d_model)
    weight: (vocab_size, d_model)   (PyTorch nn.Linear layout, NOT transposed)
    bias:   (vocab_size,)
    returns (batch, seq, vocab_size) in x.dtype
    """
    batch, seq, d_model = x.shape
    vocab_size = weight.shape[0]
    assert weight.shape == (vocab_size, d_model)
    assert bias.shape == (vocab_size,)

    out_dtype = x.dtype
    M = batch * seq
    x2d = x.reshape(M, d_model)

    # Clamp tiles to the problem size, then pad dims up to tile multiples.
    tile_m = min(tile_m, M)
    tile_n = min(tile_n, vocab_size)
    m_tiles = pl.cdiv(M, tile_m)
    n_tiles = pl.cdiv(vocab_size, tile_n)
    Mp = m_tiles * tile_m
    Vp = n_tiles * tile_n

    if Mp != M:
        x2d = jnp.pad(x2d, ((0, Mp - M), (0, 0)))
    w = weight
    b = bias
    if Vp != vocab_size:
        w = jnp.pad(w, ((0, Vp - vocab_size), (0, 0)))
        b = jnp.pad(b, ((0, Vp - vocab_size),))

    # bf16 inputs (half the HBM bytes — this op is weight-bandwidth bound),
    # bias kept in f32 and added to the f32 accumulator before the final cast.
    xc = x2d.astype(compute_dtype)
    wc = w.astype(compute_dtype)
    b2d = b.reshape(1, Vp).astype(jnp.float32)

    # Pick grid order so the operand that gets re-streamed is the cheaper one:
    #   vocab innermost  -> x tile resident, weight streamed m_tiles times
    #   vocab outermost  -> weight tile resident, x streamed n_tiles times
    x_bytes = Mp * d_model
    w_bytes = Vp * d_model
    vocab_inner = w_bytes * (m_tiles - 1) <= x_bytes * (n_tiles - 1)

    if vocab_inner:
        grid = (m_tiles, n_tiles)
        x_map = lambda i, j: (i, 0)
        w_map = lambda i, j: (j, 0)
        b_map = lambda i, j: (0, j)
        o_map = lambda i, j: (i, j)
    else:
        grid = (n_tiles, m_tiles)
        x_map = lambda j, i: (i, 0)
        w_map = lambda j, i: (j, 0)
        b_map = lambda j, i: (0, j)
        o_map = lambda j, i: (i, j)

    itemsize = jnp.dtype(compute_dtype).itemsize
    cost = pl.CostEstimate(
        flops=2 * M * d_model * vocab_size,
        transcendentals=0,
        bytes_accessed=(Mp * d_model * itemsize          # activations
                        + Vp * d_model * itemsize        # weight
                        + Vp * 4                         # bias
                        + Mp * Vp * jnp.dtype(out_dtype).itemsize),  # logits
    )

    out = pl.pallas_call(
        _generator_kernel,
        out_shape=jax.ShapeDtypeStruct((Mp, Vp), out_dtype),
        grid_spec=pltpu.PrefetchScalarGridSpec(
            num_scalar_prefetch=0,
            grid=grid,
            in_specs=[
                pl.BlockSpec((tile_m, d_model), x_map),   # activations tile
                pl.BlockSpec((tile_n, d_model), w_map),   # weight tile (no transpose)
                pl.BlockSpec((1, tile_n), b_map),         # bias tile (f32)
            ],
            out_specs=pl.BlockSpec((tile_m, tile_n), o_map),
        ),
        compiler_params=pltpu.CompilerParams(
            dimension_semantics=("parallel", "parallel"),
        ),
        cost_estimate=cost,
    )(xc, wc, b2d)

    if Mp != M or Vp != vocab_size:
        out = out[:M, :vocab_size]
    return out.reshape(batch, seq, vocab_size)


if __name__ == "__main__":
    # Small shapes consistent with the module: Generator(d_model=32, vocab_size=256)
    batch, seq, d_model, vocab_size = 2, 8, 32, 256

    key = jax.random.PRNGKey(0)
    kx, kw, kb = jax.random.split(key, 3)

    # Deterministic parameter init (mimics nn.Linear's uniform(-1/sqrt(fan_in), ...)).
    bound = 1.0 / (d_model ** 0.5)
    x = jax.random.normal(kx, (batch, seq, d_model), dtype=jnp.float32)
    weight = jax.random.uniform(kw, (vocab_size, d_model), dtype=jnp.float32,
                                minval=-bound, maxval=bound)
    bias = jax.random.uniform(kb, (vocab_size,), dtype=jnp.float32,
                              minval=-bound, maxval=bound)

    logits = generator_forward(x, weight, bias)
    logits = jax.block_until_ready(logits)
    assert logits.shape == (batch, seq, vocab_size)

    # Reference 1: same math with bf16-cast inputs + f32 accumulation (tight).
    xb = x.astype(jnp.bfloat16).astype(jnp.float32)
    wb = weight.astype(jnp.bfloat16).astype(jnp.float32)
    ref_bf16 = xb @ wb.T + bias
    assert jnp.allclose(logits, ref_bf16, atol=1e-4, rtol=1e-4)

    # Reference 2: exact f32 nn.Linear semantics (loose, bf16 input rounding).
    ref_f32 = x @ weight.T + bias
    assert jnp.allclose(logits, ref_f32, atol=3e-2, rtol=3e-2)

    print("KERNEL_OK")
</pallas_src>

<mosaic_0001>
module attributes {stable_mosaic.version = 11 : i64} {
  func.func @_generator_kernel(%arg0: i32, %arg1: i32, %arg2: memref<16x32xbf16, #tpu.memory_space<vmem>>, %arg3: memref<256x32xbf16, #tpu.memory_space<vmem>>, %arg4: memref<1x256xf32, #tpu.memory_space<vmem>>, %arg5: memref<16x256xf32, #tpu.memory_space<vmem>>) attributes {dimension_semantics = [#tpu.dimension_semantics<parallel>, #tpu.dimension_semantics<parallel>], iteration_bounds = array<i64: 1, 1>, scalar_prefetch = 0 : i64, scratch_operands = 0 : i64, tpu.core_type = #tpu.core_type<tc>, window_params = [{transform_indices = @transform_0, window_bounds = array<i64: 16, 32>}, {transform_indices = @transform_1, window_bounds = array<i64: 256, 32>}, {transform_indices = @transform_2, window_bounds = array<i64: 1, 256>}, {transform_indices = @transform_3, window_bounds = array<i64: 16, 256>}]} {
    %c0 = arith.constant 0 : index
    %c0_0 = arith.constant 0 : index
    %0 = vector.load %arg2[%c0, %c0_0] : memref<16x32xbf16, #tpu.memory_space<vmem>>, vector<16x32xbf16>
    %c0_1 = arith.constant 0 : index
    %c0_2 = arith.constant 0 : index
    %1 = vector.load %arg3[%c0_1, %c0_2] : memref<256x32xbf16, #tpu.memory_space<vmem>>, vector<256x32xbf16>
    %cst = arith.constant dense<0.000000e+00> : vector<16x256xf32>
    %2 = tpu.matmul %0, %1, %cst {dimension_numbers = #tpu.dot_dimension_numbers<[1], [1], [0], [0], [0, 0, 1, 0], [], []>} : vector<16x32xbf16>, vector<256x32xbf16>, vector<16x256xf32> -> vector<16x256xf32>
    %c0_3 = arith.constant 0 : index
    %c0_4 = arith.constant 0 : index
    %3 = vector.load %arg4[%c0_3, %c0_4] : memref<1x256xf32, #tpu.memory_space<vmem>>, vector<1x256xf32>
    %4 = vector.broadcast %3 : vector<1x256xf32> to vector<16x256xf32>
    %5 = arith.addf %2, %4 : vector<16x256xf32>
    %c0_5 = arith.constant 0 : index
    %c0_6 = arith.constant 0 : index
    %6 = vector.load %arg5[%c0_5, %c0_6] : memref<16x256xf32, #tpu.memory_space<vmem>>, vector<16x256xf32>
    tpu.vector_store %arg5[%c0_5, %c0_6], %5 {strides = array<i32>} : memref<16x256xf32, #tpu.memory_space<vmem>>, vector<16x256xf32>,
    return
  }
  func.func @transform_0(%arg0: i32, %arg1: i32) -> (i32, i32) {
    %c0_i32 = arith.constant 0 : i32
    %c0_i32_0 = arith.constant 0 : i32
    return %arg0, %c0_i32 : i32, i32
  }
  func.func @transform_1(%arg0: i32, %arg1: i32) -> (i32, i32) {
    %c0_i32 = arith.constant 0 : i32
    %c0_i32_0 = arith.constant 0 : i32
    return %arg1, %c0_i32 : i32, i32
  }
  func.func @transform_2(%arg0: i32, %arg1: i32) -> (i32, i32) {
    %c0_i32 = arith.constant 0 : i32
    %c0_i32_0 = arith.constant 0 : i32
    return %c0_i32, %arg1 : i32, i32
  }
  func.func @transform_3(%arg0: i32, %arg1: i32) -> (i32, i32) {
    %c0_i32 = arith.constant 0 : i32
    return %arg0, %arg1 : i32, i32
  }
}

</mosaic_0001>

<llo_original>
// kernel: tpu_custom_call.1
$region0: #{tpu_custom_call.1}
  #allocation0 [shape = 'u32[]', space=smem, size = 0x4, offset = 0x4, fixed_abs, tag = 'smem constant byte address 0x4 - core index']
  #allocation1 [shape = 'u32[144,128]{1,0:T(1,128)}', space=vmem, size = 0x12000, scoped, tag = 'internal scratch']
  %s0 = inlined_call_operand.vmem [shape: bf16[16,32], index: 0, kind: input, shape index: {}]
  %s1 = inlined_call_operand.vmem [shape: bf16[256,32], index: 1, kind: input, shape index: {}]
  %s2 = inlined_call_operand.vmem [shape: f32[1,256], index: 2, kind: input, shape index: {}]
  %s3 = inlined_call_operand.hbm [shape: f32[16,256], index: 3, kind: output, shape index: {}]
  %s4 = sld [smem:[#allocation0]]
  $region22: #{tpu_custom_call.1} parent=0
    _
  %s6 = ssub.s32 1, %s4
  %s7 = scalar_select 0, %s6, %s4
  $region1: #{tpu_custom_call.1} parent=0
    #allocation2 [shape = 'u8[16384]{0}', space=vmem, size = 0x4000, scoped, tag = 'output window, operand 0, single buffered']
    #allocation3 [shape = 's32[1]{0}', space=sflag, size = 0x4, scoped, tag = 'scoped memory for tpu_custom_call.1']
    %8 = vsyncpa [#allocation3], 0
    // Predicated region
    $region2: #{tpu_custom_call.1} parent=1 // pred_check
      _
    $region3: #{tpu_custom_call.1} parent=1 // pred_check_branch
      %10 = sbr.rel (0) target = $region5
    $region4: #{tpu_custom_call.1} parent=1 // pred_region
      _
    $region5: #{tpu_custom_call.1} parent=1 // pred_fallthru
      _
    // Predicated region
    $region6: #{tpu_custom_call.1} parent=1 // pred_check
      _
    $region7: #{tpu_custom_call.1} parent=1 // pred_check_branch
      %12 = sbr.rel (0) target = $region9
    $region8: #{tpu_custom_call.1} parent=1 // pred_region
      _
    $region9: #{tpu_custom_call.1} parent=1 // pred_fallthru
      _
    // Predicated region
    $region10: #{tpu_custom_call.1} parent=1 // pred_check
      _
    $region11: #{tpu_custom_call.1} parent=1 // pred_check_branch
      %14 = sbr.rel (0) target = $region13
    $region12: #{tpu_custom_call.1} parent=1 // pred_region
      _
    $region13: #{tpu_custom_call.1} parent=1 // pred_fallthru
      _
    %v16 = vld [vmem:[%s0] sm:$0xf]
    %v17 = vld [vmem:[%s0 + $0x4] sm:$0xf]
    %v18 = vld [vmem:[%s1] sm:$0xf]
    %v19 = vld [vmem:[%s1 + $0x4] sm:$0xf]
    %v20 = vld [vmem:[%s1 + $0x8] sm:$0xf]
    %v21 = vld [vmem:[%s1 + $0xc] sm:$0xf]
    %v22 = vld [vmem:[%s1 + $0x10] sm:$0xf]
    %v23 = vld [vmem:[%s1 + $0x14] sm:$0xf]
    %v24 = vld [vmem:[%s1 + $0x18] sm:$0xf]
    %v25 = vld [vmem:[%s1 + $0x1c] sm:$0xf]
    %v26 = vld [vmem:[%s1 + $0x20] sm:$0xf]
    %v27 = vld [vmem:[%s1 + $0x24] sm:$0xf]
    %v28 = vld [vmem:[%s1 + $0x28] sm:$0xf]
    %v29 = vld [vmem:[%s1 + $0x2c] sm:$0xf]
    %v30 = vld [vmem:[%s1 + $0x30] sm:$0xf]
    %v31 = vld [vmem:[%s1 + $0x34] sm:$0xf]
    %v32 = vld [vmem:[%s1 + $0x38] sm:$0xf]
    %v33 = vld [vmem:[%s1 + $0x3c] sm:$0xf]
    %v34 = vld [vmem:[%s1 + $0x40] sm:$0xf]
    %v35 = vld [vmem:[%s1 + $0x44] sm:$0xf]
    %v36 = vld [vmem:[%s1 + $0x48] sm:$0xf]
    %v37 = vld [vmem:[%s1 + $0x4c] sm:$0xf]
    %v38 = vld [vmem:[%s1 + $0x50] sm:$0xf]
    %v39 = vld [vmem:[%s1 + $0x54] sm:$0xf]
    %v40 = vld [vmem:[%s1 + $0x58] sm:$0xf]
    %v41 = vld [vmem:[%s1 + $0x5c] sm:$0xf]
    %v42 = vld [vmem:[%s1 + $0x60] sm:$0xf]
    %v43 = vld [vmem:[%s1 + $0x64] sm:$0xf]
    %v44 = vld [vmem:[%s1 + $0x68] sm:$0xf]
    %v45 = vld [vmem:[%s1 + $0x6c] sm:$0xf]
    %v46 = vld [vmem:[%s1 + $0x70] sm:$0xf]
    %v47 = vld [vmem:[%s1 + $0x74] sm:$0xf]
    %v48 = vld [vmem:[%s1 + $0x78] sm:$0xf]
    %v49 = vld [vmem:[%s1 + $0x7c] sm:$0xf]
    %v50 = vld [vmem:[%s2] sm:$0x3]
    %v52 = vlaneseq
    %v53 = vshrl.u32 %v52, 7
    %v54 = vsub.s32 0, %v53
    %v55 = vrot.slane %v50, %v54
    %v56 = vlaneseq
    %v57 = vshrl.u32 %v56, 7
    %v58 = vsub.s32 1, %v57
    %v59 = vrot.slane %v50, %v58
    %v64 = vunpack.c.l.b16 %v16
    %v65 = vunpack.c.l.b16 %v17
    %v66 = vpack.c.b16 %v65, %v64
    %v99 = vunpack.c.l.b16 %v18
    %v100 = vunpack.c.l.b16 %v19
    %v101 = vunpack.c.l.b16 %v20
    %v102 = vunpack.c.l.b16 %v21
    %v103 = vunpack.c.l.b16 %v22
    %v104 = vunpack.c.l.b16 %v23
    %v105 = vunpack.c.l.b16 %v24
    %v106 = vunpack.c.l.b16 %v25
    %v107 = vunpack.c.l.b16 %v26
    %v108 = vunpack.c.l.b16 %v27
    %v109 = vunpack.c.l.b16 %v28
    %v110 = vunpack.c.l.b16 %v29
    %v111 = vunpack.c.l.b16 %v30
    %v112 = vunpack.c.l.b16 %v31
    %v113 = vunpack.c.l.b16 %v32
    %v114 = vunpack.c.l.b16 %v33
    %v115 = vunpack.c.l.b16 %v34
    %v116 = vunpack.c.l.b16 %v35
    %v117 = vunpack.c.l.b16 %v36
    %v118 = vunpack.c.l.b16 %v37
    %v119 = vunpack.c.l.b16 %v38
    %v120 = vunpack.c.l.b16 %v39
    %v121 = vunpack.c.l.b16 %v40
    %v122 = vunpack.c.l.b16 %v41
    %v123 = vunpack.c.l.b16 %v42
    %v124 = vunpack.c.l.b16 %v43
    %v125 = vunpack.c.l.b16 %v44
    %v126 = vunpack.c.l.b16 %v45
    %v127 = vunpack.c.l.b16 %v46
    %v128 = vunpack.c.l.b16 %v47
    %v129 = vunpack.c.l.b16 %v48
    %v130 = vunpack.c.l.b16 %v49
    %v131 = vpack.c.b16 %v100, %v99
    %v132 = vpack.c.b16 %v102, %v101
    %v133 = vpack.c.b16 %v104, %v103
    %v134 = vpack.c.b16 %v106, %v105
    %v135 = vpack.c.b16 %v108, %v107
    %v136 = vpack.c.b16 %v110, %v109
    %v137 = vpack.c.b16 %v112, %v111
    %v138 = vpack.c.b16 %v114, %v113
    %v139 = vpack.c.b16 %v116, %v115
    %v140 = vpack.c.b16 %v118, %v117
    %v141 = vpack.c.b16 %v120, %v119
    %v142 = vpack.c.b16 %v122, %v121
    %v143 = vpack.c.b16 %v124, %v123
    %v144 = vpack.c.b16 %v126, %v125
    %v145 = vpack.c.b16 %v128, %v127
    %v146 = vpack.c.b16 %v130, %v129
    %vm147 = vcmask 261120
    %v149 = vsel %vm147, %v66, 0
    %v152 = vsel %vm147, %v131, 0
    %v155 = vsel %vm147, %v132, 0
    %v158 = vsel %vm147, %v133, 0
    %v161 = vsel %vm147, %v134, 0
    %v164 = vsel %vm147, %v135, 0
    %v167 = vsel %vm147, %v136, 0
    %v170 = vsel %vm147, %v137, 0
    %v173 = vsel %vm147, %v138, 0
    %v176 = vsel %vm147, %v139, 0
    %v179 = vsel %vm147, %v140, 0
    %v182 = vsel %vm147, %v141, 0
    %v185 = vsel %vm147, %v142, 0
    %v188 = vsel %vm147, %v143, 0
    %v191 = vsel %vm147, %v144, 0
    %v194 = vsel %vm147, %v145, 0
    %v197 = vsel %vm147, %v146, 0
    %199 = vmatprep.subr.bf16.mxu0 0
    %200 = vmatpush1.bf16.xpose.msra.mxu0 %v152
    %201 = vmatprep.subr.bf16.mxu0 0
    %202 = vmatpush1.bf16.xpose.msra.mxu0 %v155
    %203 = vmatprep.subr.bf16.mxu0 0
    %204 = vmatpush1.bf16.xpose.msra.mxu0 %v158
    %205 = vmatprep.subr.bf16.mxu0 0
    %206 = vmatpush1.bf16.xpose.msra.mxu0 %v161
    %207 = vmatprep.subr.bf16.mxu0 0
    %208 = vmatpush1.bf16.xpose.msra.mxu0 %v164
    %209 = vmatprep.subr.bf16.mxu0 0
    %210 = vmatpush1.bf16.xpose.msra.mxu0 %v167
    %211 = vmatprep.subr.bf16.mxu0 0
    %212 = vmatpush1.bf16.xpose.msra.mxu0 %v170
    %213 = vmatprep.subr.bf16.mxu0 0
    %214 = vmatpush1.bf16.xpose.msra.mxu0 %v173
    %215 = vmatprep.subr.bf16.mxu0 0
    %216 = vmatpush1.bf16.xpose.msra.mxu0 %v176
    %217 = vmatprep.subr.bf16.mxu0 0
    %218 = vmatpush1.bf16.xpose.msra.mxu0 %v179
    %219 = vmatprep.subr.bf16.mxu0 0
    %220 = vmatpush1.bf16.xpose.msra.mxu0 %v182
    %221 = vmatprep.subr.bf16.mxu0 0
    %222 = vmatpush1.bf16.xpose.msra.mxu0 %v185
    %223 = vmatprep.subr.bf16.mxu0 0
    %224 = vmatpush1.bf16.xpose.msra.mxu0 %v188
    %225 = vmatprep.subr.bf16.mxu0 0
    %226 = vmatpush1.bf16.xpose.msra.mxu0 %v191
    %227 = vmatprep.subr.bf16.mxu0 0
    %228 = vmatpush1.bf16.xpose.msra.mxu0 %v194
    %229 = vmatprep.subr.bf16.mxu0 0
    %230 = vmatpush1.bf16.xpose.msra.mxu0 %v197
    %231 = vmatprep.mubr.bf16.mxu0 0
    %232 = vmatmul.mubr.bf16.gmra.mrb[0].mxu0 %v149
    %v233 = vpop.f32.mrb[0].mxu0
    %v234 = vadd.f32 %v55, %v233
    %v235 = vpop.f32.mrb[0].mxu0
    %v236 = vadd.f32 %v59, %v235
    %v237 = vpop.f32.mrb[0].mxu0
    %v238 = vadd.f32 %v55, %v237
    %v239 = vpop.f32.mrb[0].mxu0
    %v240 = vadd.f32 %v59, %v239
    %241 = vdwg.mxu0
    %242 = vst [vmem:[#allocation2] sm:$0xff] %v234
    %243 = vst [vmem:[#allocation2 + $0x8] sm:$0xff] %v236
    %244 = vst [vmem:[#allocation2 + $0x10] sm:$0xff] %v238
    %245 = vst [vmem:[#allocation2 + $0x18] sm:$0xff] %v240
    // Predicated region
    $region14: #{tpu_custom_call.1} parent=1 // pred_check
      _
    $region15: #{tpu_custom_call.1} parent=1 // pred_check_branch
      %247 = sbr.rel (0) target = $region17
    $region16: #{tpu_custom_call.1} parent=1 // pred_region
      %s249 = ssub.s32 512, 512
      %250 = vsyncadd [#allocation3], %s249
      %s251 = sshll.u32 [#allocation2], 4
      %s252 = int_to_ptr.vmem [resolvable:$true] %s251
      %257 = dma.vmem_to_hbm [thread:$0]  %s252, 512, %s3, [#allocation3], 256, 256, 16
    $region17: #{tpu_custom_call.1} parent=1 // pred_fallthru
      _
    // Predicated region
    $region18: #{tpu_custom_call.1} parent=1 // pred_check
      _
    $region19: #{tpu_custom_call.1} parent=1 // pred_check_branch
      %259 = sbr.rel (0) target = $region21
    $region20: #{tpu_custom_call.1} parent=1 // pred_region
      %260 = dma.done [#allocation3], 512
    $region21: #{tpu_custom_call.1} parent=1 // pred_fallthru
      _
    %261 = vsyncpa [#allocation3], 1

</llo_original>
